<compile_context>
chip_gen: v5e
topology: v5e:2x2
jax: 0.10.0
libtpu: 0.0.40
codegen_flags: <defaults>
</compile_context>

<pallas_src>
import jax
import jax.numpy as jnp
from jax.experimental import pallas as pl
from jax.experimental.pallas import tpu as pltpu


# ----------------------------------------------------------------------------
# Fused Pallas kernel: one grid step == one batch element's full attention.
# ----------------------------------------------------------------------------
def attention_kernel(vi_ref, vq_ref, wi_ref, bi_ref, wq_ref, bq_ref,
                     wa_ref, ba_ref, u_ref):
    vi = vi_ref[0]                      # (S, F)  f32 image features
    vq = vq_ref[0]                      # (1, F)  f32 question feature

    # --- two Linear layers on the MXU (bf16 operands, f32 accumulation) -----
    hi = jnp.dot(vi.astype(jnp.bfloat16), wi_ref[...],
                 preferred_element_type=jnp.float32) + bi_ref[...]   # (S, C)
    hq = jnp.dot(vq.astype(jnp.bfloat16), wq_ref[...],
                 preferred_element_type=jnp.float32) + bq_ref[...]   # (1, C)

    # --- f32 epilogue: tanh(hi + hq) with hq broadcast over S ---------------
    ha = jnp.tanh(hi + hq)                                           # (S, C)
    # TODO(synk): nn.Dropout(p=0.5) is identity in eval/inference mode;
    #             training-mode stochastic dropout (pltpu.prng_*) is omitted.

    # --- ff_attention: Linear(C, 1) as VPU mul + lane reduce (avoid N=1 MXU)
    logits = jnp.sum(ha * wa_ref[...], axis=-1, keepdims=True) + ba_ref[...]  # (S, 1)

    # --- softmax over the S (sublane) axis -----------------------------------
    m = jnp.max(logits, axis=0, keepdims=True)
    e = jnp.exp(logits - m)
    pi = e / jnp.sum(e, axis=0, keepdims=True)                       # (S, 1)

    # --- attended image feature + residual question feature -----------------
    vi_att = jnp.sum(pi * vi, axis=0, keepdims=True)                 # (1, F)
    u_ref[0] = (vi_att + vq).astype(u_ref.dtype)


def attention_forward(vi, vq, params):
    """vi: (B, S, F) f32, vq: (B, F) f32 -> u: (B, F) f32."""
    B, S, F = vi.shape
    wi, bi = params["ff_image"]       # (F, C), (1, C)   (weights pre-transposed)
    wq, bq = params["ff_questions"]   # (F, C), (1, C)
    wa, ba = params["ff_attention"]   # (1, C), (1, 1)
    C = wi.shape[1]

    # bf16 weights for the MXU (halves weight HBM traffic too).
    wi_b = wi.astype(jnp.bfloat16)
    wq_b = wq.astype(jnp.bfloat16)

    vq3 = vq.reshape(B, 1, F)         # keep last-two block dims (full, 128)

    u3 = pl.pallas_call(
        attention_kernel,
        out_shape=jax.ShapeDtypeStruct((B, 1, F), jnp.float32),
        grid_spec=pltpu.PrefetchScalarGridSpec(
            num_scalar_prefetch=0,
            grid=(B,),
            in_specs=[
                pl.BlockSpec((1, S, F), lambda b: (b, 0, 0)),   # vi per batch
                pl.BlockSpec((1, 1, F), lambda b: (b, 0, 0)),   # vq per batch
                pl.BlockSpec((F, C), lambda b: (0, 0)),         # W_image (bf16)
                pl.BlockSpec((1, C), lambda b: (0, 0)),         # b_image
                pl.BlockSpec((F, C), lambda b: (0, 0)),         # W_question (bf16)
                pl.BlockSpec((1, C), lambda b: (0, 0)),         # b_question
                pl.BlockSpec((1, C), lambda b: (0, 0)),         # W_attention row
                pl.BlockSpec((1, 1), lambda b: (0, 0)),         # b_attention
            ],
            out_specs=pl.BlockSpec((1, 1, F), lambda b: (b, 0, 0)),
        ),
        compiler_params=pltpu.CompilerParams(
            dimension_semantics=("parallel",),
        ),
    )(vi, vq3, wi_b, bi, wq_b, bq, wa, ba)
    return u3.reshape(B, F)


# ----------------------------------------------------------------------------
# Deterministic synthetic parameters (PyTorch Linear weights stored transposed)
# ----------------------------------------------------------------------------
def init_params(key, feature_size, num_channels):
    k1, k2, k3, k4, k5, k6 = jax.random.split(key, 6)
    s_f = 1.0 / jnp.sqrt(float(feature_size))
    s_c = 1.0 / jnp.sqrt(float(num_channels))
    wi = jax.random.normal(k1, (feature_size, num_channels), jnp.float32) * s_f
    bi = jax.random.normal(k2, (1, num_channels), jnp.float32) * 0.01
    wq = jax.random.normal(k3, (feature_size, num_channels), jnp.float32) * s_f
    bq = jax.random.normal(k4, (1, num_channels), jnp.float32) * 0.01
    wa = jax.random.normal(k5, (1, num_channels), jnp.float32) * s_c
    ba = jax.random.normal(k6, (1, 1), jnp.float32) * 0.01
    return {"ff_image": (wi, bi), "ff_questions": (wq, bq),
            "ff_attention": (wa, ba)}


# ----------------------------------------------------------------------------
# Pure-JAX f32 reference (inference mode: dropout is identity)
# ----------------------------------------------------------------------------
def reference(vi, vq, params):
    wi, bi = params["ff_image"]
    wq, bq = params["ff_questions"]
    wa, ba = params["ff_attention"]
    hi = jnp.einsum("bsf,fc->bsc", vi, wi,
                    precision=jax.lax.Precision.HIGHEST) + bi
    hq = (jnp.einsum("bf,fc->bc", vq, wq,
                     precision=jax.lax.Precision.HIGHEST) + bq)[:, None, :]
    ha = jnp.tanh(hi + hq)
    logits = jnp.sum(ha * wa, axis=-1, keepdims=True) + ba     # (B, S, 1)
    pi = jax.nn.softmax(logits, axis=1)
    vi_att = jnp.sum(pi * vi, axis=1)                          # (B, F)
    return vi_att + vq


if __name__ == "__main__":
    key = jax.random.PRNGKey(0)
    k_vi, k_vq, k_p = jax.random.split(key, 3)

    # Small but lane/sublane-aligned shapes (feedback: keep dims multiples of
    # 8/128 so all loads/stores are unmasked and the MXU runs full-width).
    B, S = 4, 128                 # batch, number of image regions
    feature_size = 128            # F
    num_channels = 128            # C

    vi = jax.random.normal(k_vi, (B, S, feature_size), jnp.float32)
    vq = jax.random.normal(k_vq, (B, feature_size), jnp.float32)
    params = init_params(k_p, feature_size, num_channels)

    u = attention_forward(vi, vq, params)
    u = jax.block_until_ready(u)

    ref = reference(vi, vq, params)
    assert u.shape == (B, feature_size), u.shape
    max_err = float(jnp.max(jnp.abs(u - ref)))
    # bf16 MXU operands (f32 accumulation) vs an f32-HIGHEST reference.
    assert jnp.allclose(u, ref, atol=2e-2, rtol=2e-2), max_err

    print("KERNEL_OK")
</pallas_src>

<mosaic_0001>
module attributes {stable_mosaic.version = 11 : i64} {
  func.func @attention_kernel(%arg0: i32, %arg1: memref<1x128x128xf32, #tpu.memory_space<vmem>>, %arg2: memref<1x1x128xf32, #tpu.memory_space<vmem>>, %arg3: memref<128x128xbf16, #tpu.memory_space<vmem>>, %arg4: memref<1x128xf32, #tpu.memory_space<vmem>>, %arg5: memref<128x128xbf16, #tpu.memory_space<vmem>>, %arg6: memref<1x128xf32, #tpu.memory_space<vmem>>, %arg7: memref<1x128xf32, #tpu.memory_space<vmem>>, %arg8: memref<1x1xf32, #tpu.memory_space<vmem>>, %arg9: memref<1x1x128xf32, #tpu.memory_space<vmem>>) attributes {dimension_semantics = [#tpu.dimension_semantics<parallel>], iteration_bounds = array<i64: 4>, scalar_prefetch = 0 : i64, scratch_operands = 0 : i64, tpu.core_type = #tpu.core_type<tc>, window_params = [{transform_indices = @transform_0, window_bounds = array<i64: 1, 128, 128>}, {transform_indices = @transform_1, window_bounds = array<i64: 1, 1, 128>}, {pipeline_mode = #tpu.pipeline_mode<synchronous>, transform_indices = @transform_2, window_bounds = array<i64: 128, 128>}, {pipeline_mode = #tpu.pipeline_mode<synchronous>, transform_indices = @transform_3, window_bounds = array<i64: 1, 128>}, {pipeline_mode = #tpu.pipeline_mode<synchronous>, transform_indices = @transform_4, window_bounds = array<i64: 128, 128>}, {pipeline_mode = #tpu.pipeline_mode<synchronous>, transform_indices = @transform_5, window_bounds = array<i64: 1, 128>}, {pipeline_mode = #tpu.pipeline_mode<synchronous>, transform_indices = @transform_6, window_bounds = array<i64: 1, 128>}, {pipeline_mode = #tpu.pipeline_mode<synchronous>, transform_indices = @transform_7, window_bounds = array<i64: 1, 1>}, {transform_indices = @transform_8, window_bounds = array<i64: 1, 1, 128>}]} {
    %c0 = arith.constant 0 : index
    %c0_0 = arith.constant 0 : index
    %c0_1 = arith.constant 0 : index
    %0 = vector.load %arg1[%c0, %c0_0, %c0_1] : memref<1x128x128xf32, #tpu.memory_space<vmem>>, vector<1x128x128xf32>
    %1 = vector.shape_cast %0 : vector<1x128x128xf32> to vector<128x128xf32>
    %c0_2 = arith.constant 0 : index
    %c0_3 = arith.constant 0 : index
    %c0_4 = arith.constant 0 : index
    %2 = vector.load %arg2[%c0_2, %c0_3, %c0_4] : memref<1x1x128xf32, #tpu.memory_space<vmem>>, vector<1x1x128xf32>
    %3 = vector.shape_cast %2 : vector<1x1x128xf32> to vector<1x128xf32>
    %4 = arith.truncf %1 : vector<128x128xf32> to vector<128x128xbf16>
    %c0_5 = arith.constant 0 : index
    %c0_6 = arith.constant 0 : index
    %5 = vector.load %arg3[%c0_5, %c0_6] : memref<128x128xbf16, #tpu.memory_space<vmem>>, vector<128x128xbf16>
    %cst = arith.constant dense<0.000000e+00> : vector<128x128xf32>
    %6 = tpu.matmul %4, %5, %cst {dimension_numbers = #tpu.dot_dimension_numbers<[1], [0], [0], [1], [0, 0, 1, 1], [], []>} : vector<128x128xbf16>, vector<128x128xbf16>, vector<128x128xf32> -> vector<128x128xf32>
    %c0_7 = arith.constant 0 : index
    %c0_8 = arith.constant 0 : index
    %7 = vector.load %arg4[%c0_7, %c0_8] : memref<1x128xf32, #tpu.memory_space<vmem>>, vector<1x128xf32>
    %8 = vector.broadcast %7 : vector<1x128xf32> to vector<128x128xf32>
    %9 = arith.addf %6, %8 : vector<128x128xf32>
    %10 = arith.truncf %3 : vector<1x128xf32> to vector<1x128xbf16>
    %c0_9 = arith.constant 0 : index
    %c0_10 = arith.constant 0 : index
    %11 = vector.load %arg5[%c0_9, %c0_10] : memref<128x128xbf16, #tpu.memory_space<vmem>>, vector<128x128xbf16>
    %cst_11 = arith.constant dense<0.000000e+00> : vector<1x128xf32>
    %12 = tpu.matmul %10, %11, %cst_11 {dimension_numbers = #tpu.dot_dimension_numbers<[1], [0], [0], [1], [0, 0, 1, 1], [], []>} : vector<1x128xbf16>, vector<128x128xbf16>, vector<1x128xf32> -> vector<1x128xf32>
    %c0_12 = arith.constant 0 : index
    %c0_13 = arith.constant 0 : index
    %13 = vector.load %arg6[%c0_12, %c0_13] : memref<1x128xf32, #tpu.memory_space<vmem>>, vector<1x128xf32>
    %14 = arith.addf %12, %13 : vector<1x128xf32>
    %15 = vector.broadcast %14 : vector<1x128xf32> to vector<128x128xf32>
    %16 = arith.addf %9, %15 : vector<128x128xf32>
    %17 = math.tanh %16 : vector<128x128xf32>
    %c0_14 = arith.constant 0 : index
    %c0_15 = arith.constant 0 : index
    %18 = vector.load %arg7[%c0_14, %c0_15] : memref<1x128xf32, #tpu.memory_space<vmem>>, vector<1x128xf32>
    %19 = vector.broadcast %18 : vector<1x128xf32> to vector<128x128xf32>
    %20 = arith.mulf %17, %19 : vector<128x128xf32>
    %cst_16 = arith.constant dense<0.000000e+00> : vector<128xf32>
    %21 = vector.multi_reduction <add>, %20, %cst_16 [1] : vector<128x128xf32> to vector<128xf32>
    %22 = vector.shape_cast %21 : vector<128xf32> to vector<128x1xf32>
    %c0_17 = arith.constant 0 : index
    %c0_18 = arith.constant 0 : index
    %23 = vector.load %arg8[%c0_17, %c0_18] : memref<1x1xf32, #tpu.memory_space<vmem>>, vector<1x1xf32>
    %24 = vector.broadcast %23 : vector<1x1xf32> to vector<128x1xf32>
    %25 = arith.addf %22, %24 : vector<128x1xf32>
    %cst_19 = arith.constant dense<0xFF800000> : vector<1xf32>
    %26 = vector.multi_reduction <maximumf>, %25, %cst_19 [0] : vector<128x1xf32> to vector<1xf32>
    %27 = vector.shape_cast %26 : vector<1xf32> to vector<1x1xf32>
    %28 = vector.broadcast %27 : vector<1x1xf32> to vector<128x1xf32>
    %29 = arith.subf %25, %28 : vector<128x1xf32>
    %30 = math.exp %29 : vector<128x1xf32>
    %cst_20 = arith.constant dense<0.000000e+00> : vector<1xf32>
    %31 = vector.multi_reduction <add>, %30, %cst_20 [0] : vector<128x1xf32> to vector<1xf32>
    %32 = vector.shape_cast %31 : vector<1xf32> to vector<1x1xf32>
    %33 = vector.broadcast %32 : vector<1x1xf32> to vector<128x1xf32>
    %34 = arith.divf %30, %33 : vector<128x1xf32>
    %35 = vector.broadcast %34 : vector<128x1xf32> to vector<128x128xf32>
    %36 = arith.mulf %35, %1 : vector<128x128xf32>
    %cst_21 = arith.constant dense<0.000000e+00> : vector<128xf32>
    %37 = vector.multi_reduction <add>, %36, %cst_21 [0] : vector<128x128xf32> to vector<128xf32>
    %38 = vector.shape_cast %37 : vector<128xf32> to vector<1x128xf32>
    %39 = arith.addf %38, %3 : vector<1x128xf32>
    %c0_22 = arith.constant 0 : index
    %c0_23 = arith.constant 0 : index
    %c0_24 = arith.constant 0 : index
    %40 = vector.load %arg9[%c0_22, %c0_23, %c0_24] : memref<1x1x128xf32, #tpu.memory_space<vmem>>, vector<1x1x128xf32>
    %41 = vector.shape_cast %40 : vector<1x1x128xf32> to vector<1x128xf32>
    %42 = vector.shape_cast %39 : vector<1x128xf32> to vector<1x1x128xf32>
    tpu.vector_store %arg9[%c0_22, %c0_23, %c0_24], %42 {strides = array<i32>} : memref<1x1x128xf32, #tpu.memory_space<vmem>>, vector<1x1x128xf32>,
    return
  }
  func.func @transform_0(%arg0: i32) -> (i32, i32, i32) {
    %c0_i32 = arith.constant 0 : i32
    %c0_i32_0 = arith.constant 0 : i32
    %c0_i32_1 = arith.constant 0 : i32
    return %arg0, %c0_i32, %c0_i32_0 : i32, i32, i32
  }
  func.func @transform_1(%arg0: i32) -> (i32, i32, i32) {
    %c0_i32 = arith.constant 0 : i32
    %c0_i32_0 = arith.constant 0 : i32
    %c0_i32_1 = arith.constant 0 : i32
    return %arg0, %c0_i32, %c0_i32_0 : i32, i32, i32
  }
  func.func @transform_2(%arg0: i32) -> (i32, i32) {
    %c0_i32 = arith.constant 0 : i32
    %c0_i32_0 = arith.constant 0 : i32
    %c0_i32_1 = arith.constant 0 : i32
    return %c0_i32, %c0_i32_0 : i32, i32
  }
  func.func @transform_3(%arg0: i32) -> (i32, i32) {
    %c0_i32 = arith.constant 0 : i32
    %c0_i32_0 = arith.constant 0 : i32
    %c0_i32_1 = arith.constant 0 : i32
    return %c0_i32, %c0_i32_0 : i32, i32
  }
  func.func @transform_4(%arg0: i32) -> (i32, i32) {
    %c0_i32 = arith.constant 0 : i32
    %c0_i32_0 = arith.constant 0 : i32
    %c0_i32_1 = arith.constant 0 : i32
    return %c0_i32, %c0_i32_0 : i32, i32
  }
  func.func @transform_5(%arg0: i32) -> (i32, i32) {
    %c0_i32 = arith.constant 0 : i32
    %c0_i32_0 = arith.constant 0 : i32
    %c0_i32_1 = arith.constant 0 : i32
    return %c0_i32, %c0_i32_0 : i32, i32
  }
  func.func @transform_6(%arg0: i32) -> (i32, i32) {
    %c0_i32 = arith.constant 0 : i32
    %c0_i32_0 = arith.constant 0 : i32
    %c0_i32_1 = arith.constant 0 : i32
    return %c0_i32, %c0_i32_0 : i32, i32
  }
  func.func @transform_7(%arg0: i32) -> (i32, i32) {
    %c0_i32 = arith.constant 0 : i32
    %c0_i32_0 = arith.constant 0 : i32
    %c0_i32_1 = arith.constant 0 : i32
    return %c0_i32, %c0_i32_0 : i32, i32
  }
  func.func @transform_8(%arg0: i32) -> (i32, i32, i32) {
    %c0_i32 = arith.constant 0 : i32
    %c0_i32_0 = arith.constant 0 : i32
    %c0_i32_1 = arith.constant 0 : i32
    return %arg0, %c0_i32, %c0_i32_0 : i32, i32, i32
  }
}

</mosaic_0001>

<llo_original>
// kernel: tpu_custom_call.1
$region0: #{tpu_custom_call.1}
  #allocation0 [shape = 'u32[]', space=smem, size = 0x4, offset = 0x4, fixed_abs, tag = 'smem constant byte address 0x4 - core index']
  #allocation1 [shape = 'u32[72,128]{1,0:T(1,128)}', space=vmem, size = 0x9000, scoped, tag = 'internal scratch']
  #allocation2 [shape = 'f32[1,1]{1,0:T(1,128)S(1)}', space=vmem, size = 0x200, scoped, tag = 'scoped memory for tpu_custom_call.1']
  %s0 = inlined_call_operand.hbm [shape: f32[4,128,128], index: 0, kind: input, shape index: {}]
  %s1 = inlined_call_operand.hbm [shape: f32[4,1,128], index: 1, kind: input, shape index: {}]
  %s2 = inlined_call_operand.hbm [shape: bf16[128,128], index: 2, kind: input, shape index: {}]
  %s3 = inlined_call_operand.vmem [shape: f32[1,128], index: 3, kind: input, shape index: {}]
  %s4 = inlined_call_operand.hbm [shape: bf16[128,128], index: 4, kind: input, shape index: {}]
  %s5 = inlined_call_operand.vmem [shape: f32[1,128], index: 5, kind: input, shape index: {}]
  %s6 = inlined_call_operand.vmem [shape: f32[1,128], index: 6, kind: input, shape index: {}]
  %s7 = inlined_call_operand.<no memory space> [shape: f32[1,1], index: 7, kind: input, shape index: {}]
  %s8 = inlined_call_operand.hbm [shape: f32[4,1,128], index: 8, kind: output, shape index: {}]
  %s9 = sld [smem:[#allocation0]]
  $region81: #{tpu_custom_call.1} parent=0
    _
  %s11 = ssub.s32 1, %s9
  %s12 = scalar_select 0, %s11, %s9
  %v13 = vstv %s7
  %14 = vst [vmem:[#allocation2] sm:$0x1] %v13
  $region1: #{tpu_custom_call.1} parent=0
    #allocation3 [shape = 'u8[131072]{0}', space=vmem, size = 0x20000, scoped, tag = 'input window, operand 0']
    #allocation4 [shape = 's32[2]{0}', space=sflag, size = 0x8, scoped, tag = 'scoped memory for tpu_custom_call.1']
    #allocation5 [shape = 's32[2]{0}', space=sflag, size = 0x8, scoped, tag = 'scoped memory for tpu_custom_call.1']
    #allocation6 [shape = 'u8[1024]{0}', space=vmem, size = 0x400, scoped, tag = 'input window, operand 1']
    #allocation7 [shape = 's32[2]{0}', space=sflag, size = 0x8, scoped, tag = 'scoped memory for tpu_custom_call.1']
    #allocation8 [shape = 'u8[32768]{0}', space=vmem, size = 0x8000, scoped, tag = 'input window, operand 2, single buffered']
    #allocation9 [shape = 'u8[32768]{0}', space=vmem, size = 0x8000, scoped, tag = 'input window, operand 4, single buffered']
    #allocation10 [shape = 's32[1]{0}', space=sflag, size = 0x4, scoped, tag = 'scoped memory for tpu_custom_call.1']
    #allocation11 [shape = 'u8[1024]{0}', space=vmem, size = 0x400, scoped, tag = 'output window, operand 0']
    %15 = vsyncpa [#allocation4], 0
    %s16 = scalar_lea.sflag [#allocation4], 1
    %17 = vsyncpa %s16, 0
    %18 = vsyncpa [#allocation7], 0
    %s19 = scalar_lea.sflag [#allocation7], 1
    %20 = vsyncpa %s19, 0
    %21 = vsyncpa [#allocation10], 0
    %22 = vsyncpa [#allocation5], 0
    %s23 = scalar_lea.sflag [#allocation5], 1
    %24 = vsyncpa %s23, 0
    loop: start=0, step=1, limit=6
    $region2: #{tpu_custom_call.1} parent=1 // loop_pre_header
      _
    $region3: #{tpu_custom_call.1} parent=1 // loop_header
      %s26 = sphi 0, %s30
      %p27 = scmp.ge.s32.totalorder %s26, 6
      %s36 = sphi 0, %s38
      %s39 = sphi 0, %s36
      %s40 = sphi 0, %s39
      %s56 = sphi 0, %s40
      %s62 = sphi 0, %s64
      %s65 = sphi 0, %s62
      %s66 = sphi 0, %s65
      %s82 = sphi 0, %s66
      %s86 = sphi 0, %s86
      %s88 = sphi 0, %s86
      %s89 = sphi 0, %s88
      %s103 = sphi 0, %s89
      %s107 = sphi 0, %s107
      %s109 = sphi 0, %s107
      %s110 = sphi 0, %s109
      %s124 = sphi 0, %s110
      %s128 = sphi 0, %s128
      %s130 = sphi 0, %s128
      %s131 = sphi 0, %s130
      %s145 = sphi 0, %s131
      %s149 = sphi 0, %s149
      %s151 = sphi 0, %s149
      %s152 = sphi 0, %s151
      %s166 = sphi 0, %s152
      %s170 = sphi 0, %s170
      %s172 = sphi 0, %s170
      %s173 = sphi 0, %s172
      %s187 = sphi 0, %s173
      %s191 = sphi 0, %s191
      %s193 = sphi 0, %s191
      %s194 = sphi 0, %s193
      %s208 = sphi 0, %s194
      %s214 = sphi 0, %s216
      %s217 = sphi 0, %s214
      %s218 = sphi 0, %s217
      %s234 = sphi 0, %s218
    $region4: #{tpu_custom_call.1} parent=1 // loop_header_branch
      %29 = sbr.rel (%p27) target = $region8
    $region5: #{tpu_custom_call.1} parent=1 // loop_body
      %s31 = ssub.s32 %s26, 1
      %s32 = ssub.s32 %s26, 2
      %s33 = sadd.s32 %s26, 1
      %s34 = ssub.s32 %s26, %s33
      %p35 = scmp.eq.s32.totalorder %s34, 0
      %s37 = sadd.s32 %s36, 1
      %s38 = scalar_select %p35, %s36, %s37
      %p41 = pneg %p35
      %p42 = scmp.eq.s32.totalorder %s26, 3
      %p43 = por %p41, %p42
      %p44 = scmp.ne.s32.totalorder %s36, %s39
      %p45 = scmp.eq.s32.totalorder %s26, 0
      %p46 = por %p44, %p45
      %p47 = scmp.ne.s32.totalorder %s36, %s39
      %p48 = scmp.eq.s32.totalorder %s31, 3
      %p49 = por %p47, %p48
      %p50 = scmp.ne.s32.totalorder %s39, %s40
      %p51 = scmp.eq.s32.totalorder %s31, 0
      %p52 = por %p50, %p51
      %p53 = scmp.ne.s32.totalorder %s39, %s40
      %p54 = scmp.eq.s32.totalorder %s32, 3
      %p55 = por %p53, %p54
      %p57 = scmp.ne.s32.totalorder %s40, %s56
      %p58 = scmp.eq.s32.totalorder %s32, 0
      %p59 = por %p57, %p58
      %s60 = ssub.s32 %s26, %s33
      %p61 = scmp.eq.s32.totalorder %s60, 0
      %s63 = sadd.s32 %s62, 1
      %s64 = scalar_select %p61, %s62, %s63
      %p67 = pneg %p61
      %p68 = scmp.eq.s32.totalorder %s26, 3
      %p69 = por %p67, %p68
      %p70 = scmp.ne.s32.totalorder %s62, %s65
      %p71 = scmp.eq.s32.totalorder %s26, 0
      %p72 = por %p70, %p71
      %p73 = scmp.ne.s32.totalorder %s62, %s65
      %p74 = scmp.eq.s32.totalorder %s31, 3
      %p75 = por %p73, %p74
      %p76 = scmp.ne.s32.totalorder %s65, %s66
      %p77 = scmp.eq.s32.totalorder %s31, 0
      %p78 = por %p76, %p77
      %p79 = scmp.ne.s32.totalorder %s65, %s66
      %p80 = scmp.eq.s32.totalorder %s32, 3
      %p81 = por %p79, %p80
      %p83 = scmp.ne.s32.totalorder %s66, %s82
      %p84 = scmp.eq.s32.totalorder %s32, 0
      %p85 = por %p83, %p84
      %s87 = sadd.s32 %s86, 1
      %p90 = scmp.eq.s32.totalorder %s26, 3
      %p91 = scmp.ne.s32.totalorder %s86, %s88
      %p92 = scmp.eq.s32.totalorder %s26, 0
      %p93 = por %p91, %p92
      %p94 = scmp.ne.s32.totalorder %s86, %s88
      %p95 = scmp.eq.s32.totalorder %s31, 3
      %p96 = por %p94, %p95
      %p97 = scmp.ne.s32.totalorder %s88, %s89
      %p98 = scmp.eq.s32.totalorder %s31, 0
      %p99 = por %p97, %p98
      %p100 = scmp.ne.s32.totalorder %s88, %s89
      %p101 = scmp.eq.s32.totalorder %s32, 3
      %p102 = por %p100, %p101
      %p104 = scmp.ne.s32.totalorder %s89, %s103
      %p105 = scmp.eq.s32.totalorder %s32, 0
      %p106 = por %p104, %p105
      %s108 = sadd.s32 %s107, 1
      %p111 = scmp.eq.s32.totalorder %s26, 3
      %p112 = scmp.ne.s32.totalorder %s107, %s109
      %p113 = scmp.eq.s32.totalorder %s26, 0
      %p114 = por %p112, %p113
      %p115 = scmp.ne.s32.totalorder %s107, %s109
      %p116 = scmp.eq.s32.totalorder %s31, 3
      %p117 = por %p115, %p116
      %p118 = scmp.ne.s32.totalorder %s109, %s110
      %p119 = scmp.eq.s32.totalorder %s31, 0
      %p120 = por %p118, %p119
      %p121 = scmp.ne.s32.totalorder %s109, %s110
      %p122 = scmp.eq.s32.totalorder %s32, 3
      %p123 = por %p121, %p122
      %p125 = scmp.ne.s32.totalorder %s110, %s124
      %p126 = scmp.eq.s32.totalorder %s32, 0
      %p127 = por %p125, %p126
      %s129 = sadd.s32 %s128, 1
      %p132 = scmp.eq.s32.totalorder %s26, 3
      %p133 = scmp.ne.s32.totalorder %s128, %s130
      %p134 = scmp.eq.s32.totalorder %s26, 0
      %p135 = por %p133, %p134
      %p136 = scmp.ne.s32.totalorder %s128, %s130
      %p137 = scmp.eq.s32.totalorder %s31, 3
      %p138 = por %p136, %p137
      %p139 = scmp.ne.s32.totalorder %s130, %s131
      %p140 = scmp.eq.s32.totalorder %s31, 0
      %p141 = por %p139, %p140
      %p142 = scmp.ne.s32.totalorder %s130, %s131
      %p143 = scmp.eq.s32.totalorder %s32, 3
      %p144 = por %p142, %p143
      %p146 = scmp.ne.s32.totalorder %s131, %s145
      %p147 = scmp.eq.s32.totalorder %s32, 0
      %p148 = por %p146, %p147
      %s150 = sadd.s32 %s149, 1
      %p153 = scmp.eq.s32.totalorder %s26, 3
      %p154 = scmp.ne.s32.totalorder %s149, %s151
      %p155 = scmp.eq.s32.totalorder %s26, 0
      %p156 = por %p154, %p155
      %p157 = scmp.ne.s32.totalorder %s149, %s151
      %p158 = scmp.eq.s32.totalorder %s31, 3
      %p159 = por %p157, %p158
      %p160 = scmp.ne.s32.totalorder %s151, %s152
      %p161 = scmp.eq.s32.totalorder %s31, 0
      %p162 = por %p160, %p161
      %p163 = scmp.ne.s32.totalorder %s151, %s152
      %p164 = scmp.eq.s32.totalorder %s32, 3
      %p165 = por %p163, %p164
      %p167 = scmp.ne.s32.totalorder %s152, %s166
      %p168 = scmp.eq.s32.totalorder %s32, 0
      %p169 = por %p167, %p168
      %s171 = sadd.s32 %s170, 1
      %p174 = scmp.eq.s32.totalorder %s26, 3
      %p175 = scmp.ne.s32.totalorder %s170, %s172
      %p176 = scmp.eq.s32.totalorder %s26, 0
      %p177 = por %p175, %p176
      %p178 = scmp.ne.s32.totalorder %s170, %s172
      %p179 = scmp.eq.s32.totalorder %s31, 3
      %p180 = por %p178, %p179
      %p181 = scmp.ne.s32.totalorder %s172, %s173
      %p182 = scmp.eq.s32.totalorder %s31, 0
      %p183 = por %p181, %p182
      %p184 = scmp.ne.s32.totalorder %s172, %s173
      %p185 = scmp.eq.s32.totalorder %s32, 3
      %p186 = por %p184, %p185
      %p188 = scmp.ne.s32.totalorder %s173, %s187
      %p189 = scmp.eq.s32.totalorder %s32, 0
      %p190 = por %p188, %p189
      %s192 = sadd.s32 %s191, 1
      %p195 = scmp.eq.s32.totalorder %s26, 3
      %p196 = scmp.ne.s32.totalorder %s191, %s193
      %p197 = scmp.eq.s32.totalorder %s26, 0
      %p198 = por %p196, %p197
      %p199 = scmp.ne.s32.totalorder %s191, %s193
      %p200 = scmp.eq.s32.totalorder %s31, 3
      %p201 = por %p199, %p200
      %p202 = scmp.ne.s32.totalorder %s193, %s194
      %p203 = scmp.eq.s32.totalorder %s31, 0
      %p204 = por %p202, %p203
      %p205 = scmp.ne.s32.totalorder %s193, %s194
      %p206 = scmp.eq.s32.totalorder %s32, 3
      %p207 = por %p205, %p206
      %p209 = scmp.ne.s32.totalorder %s194, %s208
      %p210 = scmp.eq.s32.totalorder %s32, 0
      %p211 = por %p209, %p210
      %s212 = ssub.s32 %s26, %s33
      %p213 = scmp.eq.s32.totalorder %s212, 0
      %s215 = sadd.s32 %s214, 1
      %s216 = scalar_select %p213, %s214, %s215
      %p219 = pneg %p213
      %p220 = scmp.eq.s32.totalorder %s26, 3
      %p221 = por %p219, %p220
      %p222 = scmp.ne.s32.totalorder %s214, %s217
      %p223 = scmp.eq.s32.totalorder %s26, 0
      %p224 = por %p222, %p223
      %p225 = scmp.ne.s32.totalorder %s214, %s217
      %p226 = scmp.eq.s32.totalorder %s31, 3
      %p227 = por %p225, %p226
      %p228 = scmp.ne.s32.totalorder %s217, %s218
      %p229 = scmp.eq.s32.totalorder %s31, 0
      %p230 = por %p228, %p229
      %p231 = scmp.ne.s32.totalorder %s217, %s218
      %p232 = scmp.eq.s32.totalorder %s32, 3
      %p233 = por %p231, %p232
      %p235 = scmp.ne.s32.totalorder %s218, %s234
      %p236 = scmp.eq.s32.totalorder %s32, 0
      %p237 = por %p235, %p236
      %p238 = scmp.le.s32.totalorder 1, %s26
      %p239 = scmp.lt.s32.totalorder %s26, 5
      %p240 = pnand %p238, %p239
      %p241 = pneg %p240
      // Predicated region
      $region9: #{tpu_custom_call.1} parent=5 // pred_check
        _
      $region10: #{tpu_custom_call.1} parent=5 // pred_check_branch
        %243 = sbr.rel (%p240) target = $region12
      $region11: #{tpu_custom_call.1} parent=5 // pred_region
        %s244 = ssub.s32 %s26, 1
        // Predicated region
        $region13: #{tpu_custom_call.1} parent=11 // pred_check
          %p245 = pneg %p99
        $region14: #{tpu_custom_call.1} parent=11 // pred_check_branch
          %247 = sbr.rel (%p245) target = $region16
        $region15: #{tpu_custom_call.1} parent=11 // pred_region
          %249 = vsyncadd [#allocation7], 0
          %s250 = sshll.u32 %s2, 4
          %s251 = int_to_ptr.hbm [resolvable:$true] %s250
          %s252 = sshll.u32 [#allocation8], 4
          %s253 = int_to_ptr.vmem [resolvable:$true] %s252
          %258 = dma.hbm_to_vmem [thread:$0]  %s251, 1024, %s253, [#allocation7], 64, 64, 4
        $region16: #{tpu_custom_call.1} parent=11 // pred_fallthru
          _
        // Predicated region
        $region17: #{tpu_custom_call.1} parent=11 // pred_check
          %p259 = pneg %p120
        $region18: #{tpu_custom_call.1} parent=11 // pred_check_branch
          %261 = sbr.rel (%p259) target = $region20
        $region19: #{tpu_custom_call.1} parent=11 // pred_region
          _
        $region20: #{tpu_custom_call.1} parent=11 // pred_fallthru
          _
        // Predicated region
        $region21: #{tpu_custom_call.1} parent=11 // pred_check
          %p262 = pneg %p141
        $region22: #{tpu_custom_call.1} parent=11 // pred_check_branch
          %264 = sbr.rel (%p262) target = $region24
        $region23: #{tpu_custom_call.1} parent=11 // pred_region
          %266 = vsyncadd [#allocation10], 0
          %s267 = sshll.u32 %s4, 4
          %s268 = int_to_ptr.hbm [resolvable:$true] %s267
          %s269 = sshll.u32 [#allocation9], 4
          %s270 = int_to_ptr.vmem [resolvable:$true] %s269
          %275 = dma.hbm_to_vmem [thread:$0]  %s268, 1024, %s270, [#allocation10], 64, 64, 4
        $region24: #{tpu_custom_call.1} parent=11 // pred_fallthru
          _
        // Predicated region
        $region25: #{tpu_custom_call.1} parent=11 // pred_check
          %p276 = pneg %p162
        $region26: #{tpu_custom_call.1} parent=11 // pred_check_branch
          %278 = sbr.rel (%p276) target = $region28
        $region27: #{tpu_custom_call.1} parent=11 // pred_region
          _
        $region28: #{tpu_custom_call.1} parent=11 // pred_fallthru
          _
        // Predicated region
        $region29: #{tpu_custom_call.1} parent=11 // pred_check
          %p279 = pneg %p183
        $region30: #{tpu_custom_call.1} parent=11 // pred_check_branch
          %281 = sbr.rel (%p279) target = $region32
        $region31: #{tpu_custom_call.1} parent=11 // pred_region
          _
        $region32: #{tpu_custom_call.1} parent=11 // pred_fallthru
          _
        // Predicated region
        $region33: #{tpu_custom_call.1} parent=11 // pred_check
          %p282 = pneg %p204
        $region34: #{tpu_custom_call.1} parent=11 // pred_check_branch
          %284 = sbr.rel (%p282) target = $region36
        $region35: #{tpu_custom_call.1} parent=11 // pred_region
          _
        $region36: #{tpu_custom_call.1} parent=11 // pred_fallthru
          _
      $region12: #{tpu_custom_call.1} parent=5 // pred_fallthru
        _
      %p285 = scmp.lt.s32.totalorder %s26, 4
      // Predicated region
      $region37: #{tpu_custom_call.1} parent=5 // pred_check
        %p286 = pneg %p285
      $region38: #{tpu_custom_call.1} parent=5 // pred_check_branch
        %288 = sbr.rel (%p286) target = $region40
      $region39: #{tpu_custom_call.1} parent=5 // pred_region
        // Predicated region
        $region41: #{tpu_custom_call.1} parent=39 // pred_check
          %p289 = pneg %p46
        $region42: #{tpu_custom_call.1} parent=39 // pred_check_branch
          %291 = sbr.rel (%p289) target = $region44
        $region43: #{tpu_custom_call.1} parent=39 // pred_region
          %s292 = sand.u32 %s36, 1
          %s293 = scalar_lea.sflag [#allocation4], %s292
          %s294 = sand.u32 %s36, 1
          %s295 = smul.addr %s294, 128
          %s296 = scalar_lea.vmem [#allocation3], %s295
          %298 = vsyncadd %s293, 0
          %s299 = smul.addr %s26, 16
          %s300 = smul.addr %s299, 8
          %s301 = scalar_lea.hbm %s0, %s300
          %s302 = sshll.u32 %s301, 4
          %s303 = int_to_ptr.hbm [resolvable:$true] %s302
          %s304 = sshll.u32 %s296, 4
          %s305 = int_to_ptr.vmem [resolvable:$true] %s304
          %310 = dma.hbm_to_vmem [thread:$0]  %s303, 2048, %s305, %s293, 128, 128, 8
        $region44: #{tpu_custom_call.1} parent=39 // pred_fallthru
          _
        // Predicated region
        $region45: #{tpu_custom_call.1} parent=39 // pred_check
          %p311 = pneg %p72
        $region46: #{tpu_custom_call.1} parent=39 // pred_check_branch
          %313 = sbr.rel (%p311) target = $region48
        $region47: #{tpu_custom_call.1} parent=39 // pred_region
          %s314 = sand.u32 %s26, 1
          %s315 = scalar_lea.sflag [#allocation7], %s314
          %s316 = sand.u32 %s62, 1
          %s317 = scalar_lea.vmem [#allocation6], %s316
          %319 = vsyncadd %s315, 0
          %s320 = scalar_lea.hbm %s1, %s26
          %s322 = sshll.u32 %s320, 4
          %s323 = int_to_ptr.hbm [resolvable:$true] %s322
          %s324 = sshll.u32 %s317, 4
          %s325 = int_to_ptr.vmem [resolvable:$true] %s324
          %327 = dma.hbm_to_vmem [thread:$0]  %s323, 16, %s325, %s315
        $region48: #{tpu_custom_call.1} parent=39 // pred_fallthru
          _
      $region40: #{tpu_custom_call.1} parent=5 // pred_fallthru
        _
      %p328 = scmp.le.s32.totalorder 1, %s26
      %p329 = scmp.lt.s32.totalorder %s26, 5
      %p330 = pnand %p328, %p329
      %p331 = pneg %p330
      // Predicated region
      $region49: #{tpu_custom_call.1} parent=5 // pred_check
        _
      $region50: #{tpu_custom_call.1} parent=5 // pred_check_branch
        %333 = sbr.rel (%p330) target = $region52
      $region51: #{tpu_custom_call.1} parent=5 // pred_region
        %s334 = ssub.s32 %s26, 1
        %s335 = sand.u32 %s39, 1
        %s336 = scalar_lea.sflag [#allocation4], %s335
        %s337 = sand.u32 %s39, 1
        %s338 = smul.addr %s337, 128
        %s339 = scalar_lea.vmem [#allocation3], %s338
        // Predicated region
        $region53: #{tpu_custom_call.1} parent=51 // pred_check
          %p340 = pneg %p52
        $region54: #{tpu_custom_call.1} parent=51 // pred_check_branch
          %342 = sbr.rel (%p340) target = $region56
        $region55: #{tpu_custom_call.1} parent=51 // pred_region
          %344 = dma.done %s336, 2048
        $region56: #{tpu_custom_call.1} parent=51 // pred_fallthru
          _
        %s345 = sand.u32 %s31, 1
        %s346 = scalar_lea.sflag [#allocation7], %s345
        %s347 = sand.u32 %s65, 1
        %s348 = scalar_lea.vmem [#allocation6], %s347
        // Predicated region
        $region57: #{tpu_custom_call.1} parent=51 // pred_check
          %p349 = pneg %p78
        $region58: #{tpu_custom_call.1} parent=51 // pred_check_branch
          %351 = sbr.rel (%p349) target = $region60
        $region59: #{tpu_custom_call.1} parent=51 // pred_region
          %353 = dma.done %s346, 16
        $region60: #{tpu_custom_call.1} parent=51 // pred_fallthru
          _
        // Predicated region
        $region61: #{tpu_custom_call.1} parent=51 // pred_check
          %p354 = pneg %p99
        $region62: #{tpu_custom_call.1} parent=51 // pred_check_branch
          %356 = sbr.rel (%p354) target = $region64
        $region63: #{tpu_custom_call.1} parent=51 // pred_region
          %358 = dma.done [#allocation7], 1024
        $region64: #{tpu_custom_call.1} parent=51 // pred_fallthru
          _
        // Predicated region
        $region65: #{tpu_custom_call.1} parent=51 // pred_check
          %p359 = pneg %p141
        $region66: #{tpu_custom_call.1} parent=51 // pred_check_branch
          %361 = sbr.rel (%p359) target = $region68
        $region67: #{tpu_custom_call.1} parent=51 // pred_region
          %363 = dma.done [#allocation10], 1024
        $region68: #{tpu_custom_call.1} parent=51 // pred_fallthru
          _
        %s364 = sand.u32 %s39, 1
        %s365 = scalar_lea.sflag [#allocation4], %s364
        %s366 = sand.u32 %s39, 1
        %s367 = smul.addr %s366, 128
        %s368 = scalar_lea.vmem [#allocation3], %s367
        %p369 = pneg %p52
        %p370 = pneg %p49
        %s371 = sand.u32 %s31, 1
        %s372 = scalar_lea.sflag [#allocation7], %s371
        %s373 = sand.u32 %s65, 1
        %s374 = scalar_lea.vmem [#allocation6], %s373
        %p375 = pneg %p78
        %p376 = pneg %p75
        %p377 = pneg %p99
        %p378 = pneg %p96
        %p379 = pneg %p120
        %p380 = pneg %p117
        %p381 = pneg %p141
        %p382 = pneg %p138
        %p383 = pneg %p162
        %p384 = pneg %p159
        %p385 = pneg %p183
        %p386 = pneg %p180
        %p387 = pneg %p204
        %p388 = pneg %p201
        %p389 = pneg %p230
        %p390 = pneg %p227
        %s391 = sand.u32 %s217, 1
        %s392 = scalar_lea.sflag [#allocation5], %s391
        %s393 = sand.u32 %s217, 1
        %s394 = scalar_lea.vmem [#allocation11], %s393
        %v395 = vld [vmem:[%s339] sm:$0xff]
        %v396 = vld [vmem:[%s339 + $0x8] sm:$0xff]
        %v397 = vld [vmem:[%s339 + $0x10] sm:$0xff]
        %v398 = vld [vmem:[%s339 + $0x18] sm:$0xff]
        %v399 = vld [vmem:[%s339 + $0x20] sm:$0xff]
        %v400 = vld [vmem:[%s339 + $0x28] sm:$0xff]
        %v401 = vld [vmem:[%s339 + $0x30] sm:$0xff]
        %v402 = vld [vmem:[%s339 + $0x38] sm:$0xff]
        %v403 = vld [vmem:[%s339 + $0x40] sm:$0xff]
        %v404 = vld [vmem:[%s339 + $0x48] sm:$0xff]
        %v405 = vld [vmem:[%s339 + $0x50] sm:$0xff]
        %v406 = vld [vmem:[%s339 + $0x58] sm:$0xff]
        %v407 = vld [vmem:[%s339 + $0x60] sm:$0xff]
        %v408 = vld [vmem:[%s339 + $0x68] sm:$0xff]
        %v409 = vld [vmem:[%s339 + $0x70] sm:$0xff]
        %v410 = vld [vmem:[%s339 + $0x78] sm:$0xff]
        %v411 = vld [vmem:[%s348] sm:$0x1]
        %v412 = vpack.c.bf16 %v396, %v395
        %v413 = vpack.c.bf16 %v398, %v397
        %v414 = vpack.c.bf16 %v400, %v399
        %v415 = vpack.c.bf16 %v402, %v401
        %v416 = vpack.c.bf16 %v404, %v403
        %v417 = vpack.c.bf16 %v406, %v405
        %v418 = vpack.c.bf16 %v408, %v407
        %v419 = vpack.c.bf16 %v410, %v409
        %v420 = vld [vmem:[#allocation8] sm:$0xf]
        %v421 = vld [vmem:[#allocation8 + $0x4] sm:$0xf]
        %v422 = vld [vmem:[#allocation8 + $0x8] sm:$0xf]
        %v423 = vld [vmem:[#allocation8 + $0xc] sm:$0xf]
        %v424 = vld [vmem:[#allocation8 + $0x10] sm:$0xf]
        %v425 = vld [vmem:[#allocation8 + $0x14] sm:$0xf]
        %v426 = vld [vmem:[#allocation8 + $0x18] sm:$0xf]
        %v427 = vld [vmem:[#allocation8 + $0x1c] sm:$0xf]
        %v428 = vld [vmem:[#allocation8 + $0x20] sm:$0xf]
        %v429 = vld [vmem:[#allocation8 + $0x24] sm:$0xf]
        %v430 = vld [vmem:[#allocation8 + $0x28] sm:$0xf]
        %v431 = vld [vmem:[#allocation8 + $0x2c] sm:$0xf]
        %v432 = vld [vmem:[#allocation8 + $0x30] sm:$0xf]
        %v433 = vld [vmem:[#allocation8 + $0x34] sm:$0xf]
        %v434 = vld [vmem:[#allocation8 + $0x38] sm:$0xf]
        %v435 = vld [vmem:[#allocation8 + $0x3c] sm:$0xf]
        %v436 = vld [vmem:[%s3] sm:$0x1]
        %v438 = vperm.slane %v436, 0
        %v456 = vunpack.c.l.b16 %v420
        %v457 = vunpack.c.l.b16 %v421
        %v458 = vunpack.c.l.b16 %v422
        %v459 = vunpack.c.l.b16 %v423
        %v460 = vunpack.c.l.b16 %v424
        %v461 = vunpack.c.l.b16 %v425
        %v462 = vunpack.c.l.b16 %v426
        %v463 = vunpack.c.l.b16 %v427
        %v464 = vunpack.c.l.b16 %v428
        %v465 = vunpack.c.l.b16 %v429
        %v466 = vunpack.c.l.b16 %v430
        %v467 = vunpack.c.l.b16 %v431
        %v468 = vunpack.c.l.b16 %v432
        %v469 = vunpack.c.l.b16 %v433
        %v470 = vunpack.c.l.b16 %v434
        %v471 = vunpack.c.l.b16 %v435
        %v472 = vpack.c.b16 %v457, %v456
        %v473 = vpack.c.b16 %v459, %v458
        %v474 = vpack.c.b16 %v461, %v460
        %v475 = vpack.c.b16 %v463, %v462
        %v476 = vpack.c.b16 %v465, %v464
        %v477 = vpack.c.b16 %v467, %v466
        %v478 = vpack.c.b16 %v469, %v468
        %v479 = vpack.c.b16 %v471, %v470
        %488 = vmatpush.bf16.msra.mxu0 %v479
        %489 = vmatpush.bf16.msra.mxu0 %v478
        %490 = vmatpush.bf16.msra.mxu0 %v477
        %491 = vmatpush.bf16.msra.mxu0 %v476
        %492 = vmatpush.bf16.msra.mxu0 %v475
        %493 = vmatpush.bf16.msra.mxu0 %v474
        %494 = vmatpush.bf16.msra.mxu0 %v473
        %495 = vmatpush.bf16.msra.mxu0 %v472
        %496 = vmatmul.bf16.gmra.mxu0 %v412
        %v497 = vpop.f32.mrf.mxu0
        %v498 = vadd.f32 %v438, %v497
        %v499 = vpop.f32.mrf.mxu0
        %v500 = vadd.f32 %v438, %v499
        %501 = vmatmul.bf16.gmra.mxu0 %v413
        %v502 = vpop.f32.mrf.mxu0
        %v503 = vadd.f32 %v438, %v502
        %v504 = vpop.f32.mrf.mxu0
        %v505 = vadd.f32 %v438, %v504
        %506 = vmatmul.bf16.gmra.mxu0 %v414
        %v507 = vpop.f32.mrf.mxu0
        %v508 = vadd.f32 %v438, %v507
        %v509 = vpop.f32.mrf.mxu0
        %v510 = vadd.f32 %v438, %v509
        %511 = vmatmul.bf16.gmra.mxu0 %v415
        %v512 = vpop.f32.mrf.mxu0
        %v513 = vadd.f32 %v438, %v512
        %v514 = vpop.f32.mrf.mxu0
        %v515 = vadd.f32 %v438, %v514
        %516 = vmatmul.bf16.gmra.mxu0 %v416
        %v517 = vpop.f32.mrf.mxu0
        %v518 = vadd.f32 %v438, %v517
        %v519 = vpop.f32.mrf.mxu0
        %v520 = vadd.f32 %v438, %v519
        %521 = vmatmul.bf16.gmra.mxu0 %v417
        %v522 = vpop.f32.mrf.mxu0
        %v523 = vadd.f32 %v438, %v522
        %v524 = vpop.f32.mrf.mxu0
        %v525 = vadd.f32 %v438, %v524
        %526 = vmatmul.bf16.gmra.mxu0 %v418
        %v527 = vpop.f32.mrf.mxu0
        %v528 = vadd.f32 %v438, %v527
        %v529 = vpop.f32.mrf.mxu0
        %v530 = vadd.f32 %v438, %v529
        %531 = vmatmul.bf16.gmra.mxu0 %v419
        %v532 = vpop.f32.mrf.mxu0
        %v533 = vadd.f32 %v438, %v532
        %v534 = vpop.f32.mrf.mxu0
        %v535 = vadd.f32 %v438, %v534
        %536 = vdwg.mxu0
        %v537 = vpack.c.bf16 %v411, %v411
        %v538 = vld [vmem:[#allocation9] sm:$0xf]
        %v539 = vld [vmem:[#allocation9 + $0x4] sm:$0xf]
        %v540 = vld [vmem:[#allocation9 + $0x8] sm:$0xf]
        %v541 = vld [vmem:[#allocation9 + $0xc] sm:$0xf]
        %v542 = vld [vmem:[#allocation9 + $0x10] sm:$0xf]
        %v543 = vld [vmem:[#allocation9 + $0x14] sm:$0xf]
        %v544 = vld [vmem:[#allocation9 + $0x18] sm:$0xf]
        %v545 = vld [vmem:[#allocation9 + $0x1c] sm:$0xf]
        %v546 = vld [vmem:[#allocation9 + $0x20] sm:$0xf]
        %v547 = vld [vmem:[#allocation9 + $0x24] sm:$0xf]
        %v548 = vld [vmem:[#allocation9 + $0x28] sm:$0xf]
        %v549 = vld [vmem:[#allocation9 + $0x2c] sm:$0xf]
        %v550 = vld [vmem:[#allocation9 + $0x30] sm:$0xf]
        %v551 = vld [vmem:[#allocation9 + $0x34] sm:$0xf]
        %v552 = vld [vmem:[#allocation9 + $0x38] sm:$0xf]
        %v553 = vld [vmem:[#allocation9 + $0x3c] sm:$0xf]
        %v554 = vld [vmem:[%s5] sm:$0x1]
        %v571 = vunpack.c.l.b16 %v538
        %v572 = vunpack.c.l.b16 %v539
        %v573 = vunpack.c.l.b16 %v540
        %v574 = vunpack.c.l.b16 %v541
        %v575 = vunpack.c.l.b16 %v542
        %v576 = vunpack.c.l.b16 %v543
        %v577 = vunpack.c.l.b16 %v544
        %v578 = vunpack.c.l.b16 %v545
        %v579 = vunpack.c.l.b16 %v546
        %v580 = vunpack.c.l.b16 %v547
        %v581 = vunpack.c.l.b16 %v548
        %v582 = vunpack.c.l.b16 %v549
        %v583 = vunpack.c.l.b16 %v550
        %v584 = vunpack.c.l.b16 %v551
        %v585 = vunpack.c.l.b16 %v552
        %v586 = vunpack.c.l.b16 %v553
        %v587 = vpack.c.b16 %v572, %v571
        %v588 = vpack.c.b16 %v574, %v573
        %v589 = vpack.c.b16 %v576, %v575
        %v590 = vpack.c.b16 %v578, %v577
        %v591 = vpack.c.b16 %v580, %v579
        %v592 = vpack.c.b16 %v582, %v581
        %v593 = vpack.c.b16 %v584, %v583
        %v594 = vpack.c.b16 %v586, %v585
        %603 = vmatpush.bf16.msra.mxu0 %v594
        %604 = vmatpush.bf16.msra.mxu0 %v593
        %605 = vmatpush.bf16.msra.mxu0 %v592
        %606 = vmatpush.bf16.msra.mxu0 %v591
        %607 = vmatpush.bf16.msra.mxu0 %v590
        %608 = vmatpush.bf16.msra.mxu0 %v589
        %609 = vmatpush.bf16.msra.mxu0 %v588
        %610 = vmatpush.bf16.msra.mxu0 %v587
        %611 = vmatmul.bf16.gmra.mxu0 %v537
        %v612 = vpop.f32.mrf.mxu0
        %v613 = vadd.f32 %v554, %v612
        %v614 = vpop.f32.mrf.mxu0
        %615 = vdwg.mxu0
        %v616 = vperm.slane %v613, 0
        %v617 = vadd.f32 %v498, %v616
        %v618 = vadd.f32 %v500, %v616
        %v619 = vadd.f32 %v503, %v616
        %v620 = vadd.f32 %v505, %v616
        %v621 = vadd.f32 %v508, %v616
        %v622 = vadd.f32 %v510, %v616
        %v623 = vadd.f32 %v513, %v616
        %v624 = vadd.f32 %v515, %v616
        %v625 = vadd.f32 %v518, %v616
        %v626 = vadd.f32 %v520, %v616
        %v627 = vadd.f32 %v523, %v616
        %v628 = vadd.f32 %v525, %v616
        %v629 = vadd.f32 %v528, %v616
        %v630 = vadd.f32 %v530, %v616
        %v631 = vadd.f32 %v533, %v616
        %v632 = vadd.f32 %v535, %v616
        %v633 = vtanh.pop %v617
        %v634 = vtanh.pop %v618
        %v635 = vtanh.pop %v619
        %v636 = vtanh.pop %v620
        %v637 = vtanh.pop %v621
        %v638 = vtanh.pop %v622
        %v639 = vtanh.pop %v623
        %v640 = vtanh.pop %v624
        %v641 = vtanh.pop %v625
        %v642 = vtanh.pop %v626
        %v643 = vtanh.pop %v627
        %v644 = vtanh.pop %v628
        %v645 = vtanh.pop %v629
        %v646 = vtanh.pop %v630
        %v647 = vtanh.pop %v631
        %v648 = vtanh.pop %v632
        %v649 = vld [vmem:[%s6] sm:$0x1]
        %v651 = vperm.slane %v649, 0
        %v653 = vmul.f32 %v633, %v651
        %v654 = vmul.f32 %v634, %v651
        %v655 = vmul.f32 %v635, %v651
        %v656 = vmul.f32 %v636, %v651
        %v657 = vmul.f32 %v637, %v651
        %v658 = vmul.f32 %v638, %v651
        %v659 = vmul.f32 %v639, %v651
        %v660 = vmul.f32 %v640, %v651
        %v661 = vmul.f32 %v641, %v651
        %v662 = vmul.f32 %v642, %v651
        %v663 = vmul.f32 %v643, %v651
        %v664 = vmul.f32 %v644, %v651
        %v665 = vmul.f32 %v645, %v651
        %v666 = vmul.f32 %v646, %v651
        %v667 = vmul.f32 %v647, %v651
        %v668 = vmul.f32 %v648, %v651
        %669 = vadd.xlane.f32.xlu0 %v653
        %v670 = vpop.xlane.xlu0 %669
        %671 = vadd.xlane.f32.xlu0 %v654
        %v672 = vpop.xlane.xlu0 %671
        %673 = vadd.xlane.f32.xlu0 %v655
        %v674 = vpop.xlane.xlu0 %673
        %675 = vadd.xlane.f32.xlu0 %v656
        %v676 = vpop.xlane.xlu0 %675
        %677 = vadd.xlane.f32.xlu0 %v657
        %v678 = vpop.xlane.xlu0 %677
        %679 = vadd.xlane.f32.xlu0 %v658
        %v680 = vpop.xlane.xlu0 %679
        %681 = vadd.xlane.f32.xlu0 %v659
        %v682 = vpop.xlane.xlu0 %681
        %683 = vadd.xlane.f32.xlu0 %v660
        %v684 = vpop.xlane.xlu0 %683
        %685 = vadd.xlane.f32.xlu0 %v661
        %v686 = vpop.xlane.xlu0 %685
        %687 = vadd.xlane.f32.xlu0 %v662
        %v688 = vpop.xlane.xlu0 %687
        %689 = vadd.xlane.f32.xlu0 %v663
        %v690 = vpop.xlane.xlu0 %689
        %691 = vadd.xlane.f32.xlu0 %v664
        %v692 = vpop.xlane.xlu0 %691
        %693 = vadd.xlane.f32.xlu0 %v665
        %v694 = vpop.xlane.xlu0 %693
        %695 = vadd.xlane.f32.xlu0 %v666
        %v696 = vpop.xlane.xlu0 %695
        %697 = vadd.xlane.f32.xlu0 %v667
        %v698 = vpop.xlane.xlu0 %697
        %699 = vadd.xlane.f32.xlu0 %v668
        %v700 = vpop.xlane.xlu0 %699
        %v701 = vld [vmem:[#allocation2] sm:$0x1]
        %v703 = vperm.slane %v701, 0
        %v705 = vadd.f32 %v670, %v703
        %v706 = vadd.f32 %v672, %v703
        %v707 = vadd.f32 %v674, %v703
        %v708 = vadd.f32 %v676, %v703
        %v709 = vadd.f32 %v678, %v703
        %v710 = vadd.f32 %v680, %v703
        %v711 = vadd.f32 %v682, %v703
        %v712 = vadd.f32 %v684, %v703
        %v713 = vadd.f32 %v686, %v703
        %v714 = vadd.f32 %v688, %v703
        %v715 = vadd.f32 %v690, %v703
        %v716 = vadd.f32 %v692, %v703
        %v717 = vadd.f32 %v694, %v703
        %v718 = vadd.f32 %v696, %v703
        %v719 = vadd.f32 %v698, %v703
        %v720 = vadd.f32 %v700, %v703
        %vm721 = vcmask 7168
        %v722 = vsel %vm721, %v705, -inf
        %v723 = vsel %vm721, %v706, -inf
        %v724 = vsel %vm721, %v707, -inf
        %v725 = vsel %vm721, %v708, -inf
        %v726 = vsel %vm721, %v709, -inf
        %v727 = vmax.f32 %v722, %v726
        %v728 = vsel %vm721, %v710, -inf
        %v729 = vmax.f32 %v723, %v728
        %v730 = vsel %vm721, %v711, -inf
        %v731 = vmax.f32 %v724, %v730
        %v732 = vsel %vm721, %v712, -inf
        %v733 = vmax.f32 %v725, %v732
        %v734 = vsel %vm721, %v713, -inf
        %v735 = vmax.f32 %v727, %v734
        %v736 = vsel %vm721, %v714, -inf
        %v737 = vmax.f32 %v729, %v736
        %v738 = vsel %vm721, %v715, -inf
        %v739 = vmax.f32 %v731, %v738
        %v740 = vsel %vm721, %v716, -inf
        %v741 = vmax.f32 %v733, %v740
        %v742 = vsel %vm721, %v717, -inf
        %v743 = vmax.f32 %v735, %v742
        %v744 = vsel %vm721, %v718, -inf
        %v745 = vmax.f32 %v737, %v744
        %v746 = vsel %vm721, %v719, -inf
        %v747 = vmax.f32 %v739, %v746
        %v748 = vsel %vm721, %v720, -inf
        %v749 = vmax.f32 %v741, %v748
        %v750 = vmax.f32 %v743, %v745
        %v751 = vmax.f32 %v747, %v749
        %v752 = vmax.f32 %v750, %v751
        %v753 = vrot.slane %v752, 4
        %v754 = vmax.f32 %v752, %v753
        %v755 = vrot.slane %v754, 2
        %v756 = vmax.f32 %v754, %v755
        %v757 = vrot.slane %v756, 1
        %v758 = vmax.f32 %v756, %v757
        %v759 = vsub.f32 %v705, %v758
        %v760 = vsub.f32 %v706, %v758
        %v761 = vsub.f32 %v707, %v758
        %v762 = vsub.f32 %v708, %v758
        %v763 = vsub.f32 %v709, %v758
        %v764 = vsub.f32 %v710, %v758
        %v765 = vsub.f32 %v711, %v758
        %v766 = vsub.f32 %v712, %v758
        %v767 = vsub.f32 %v713, %v758
        %v768 = vsub.f32 %v714, %v758
        %v769 = vsub.f32 %v715, %v758
        %v770 = vsub.f32 %v716, %v758
        %v771 = vsub.f32 %v717, %v758
        %v772 = vsub.f32 %v718, %v758
        %v773 = vsub.f32 %v719, %v758
        %v774 = vsub.f32 %v720, %v758
        %v775 = vmul.f32 %v759, 1.442695
        %v776 = vpow.pop %v775
        %v777 = vmul.f32 %v760, 1.442695
        %v778 = vpow.pop %v777
        %v779 = vmul.f32 %v761, 1.442695
        %v780 = vpow.pop %v779
        %v781 = vmul.f32 %v762, 1.442695
        %v782 = vpow.pop %v781
        %v783 = vmul.f32 %v763, 1.442695
        %v784 = vpow.pop %v783
        %v785 = vmul.f32 %v764, 1.442695
        %v786 = vpow.pop %v785
        %v787 = vmul.f32 %v765, 1.442695
        %v788 = vpow.pop %v787
        %v789 = vmul.f32 %v766, 1.442695
        %v790 = vpow.pop %v789
        %v791 = vmul.f32 %v767, 1.442695
        %v792 = vpow.pop %v791
        %v793 = vmul.f32 %v768, 1.442695
        %v794 = vpow.pop %v793
        %v795 = vmul.f32 %v769, 1.442695
        %v796 = vpow.pop %v795
        %v797 = vmul.f32 %v770, 1.442695
        %v798 = vpow.pop %v797
        %v799 = vmul.f32 %v771, 1.442695
        %v800 = vpow.pop %v799
        %v801 = vmul.f32 %v772, 1.442695
        %v802 = vpow.pop %v801
        %v803 = vmul.f32 %v773, 1.442695
        %v804 = vpow.pop %v803
        %v805 = vmul.f32 %v774, 1.442695
        %v806 = vpow.pop %v805
        %v807 = vsel %vm721, %v776, 0.0
        %v808 = vsel %vm721, %v778, 0.0
        %v809 = vadd.f32 %v807, %v808
        %v810 = vsel %vm721, %v780, 0.0
        %v811 = vadd.f32 %v809, %v810
        %v812 = vsel %vm721, %v782, 0.0
        %v813 = vadd.f32 %v811, %v812
        %v814 = vsel %vm721, %v784, 0.0
        %v815 = vadd.f32 %v813, %v814
        %v816 = vsel %vm721, %v786, 0.0
        %v817 = vadd.f32 %v815, %v816
        %v818 = vsel %vm721, %v788, 0.0
        %v819 = vadd.f32 %v817, %v818
        %v820 = vsel %vm721, %v790, 0.0
        %v821 = vadd.f32 %v819, %v820
        %v822 = vsel %vm721, %v792, 0.0
        %v823 = vadd.f32 %v821, %v822
        %v824 = vsel %vm721, %v794, 0.0
        %v825 = vadd.f32 %v823, %v824
        %v826 = vsel %vm721, %v796, 0.0
        %v827 = vadd.f32 %v825, %v826
        %v828 = vsel %vm721, %v798, 0.0
        %v829 = vadd.f32 %v827, %v828
        %v830 = vsel %vm721, %v800, 0.0
        %v831 = vadd.f32 %v829, %v830
        %v832 = vsel %vm721, %v802, 0.0
        %v833 = vadd.f32 %v831, %v832
        %v834 = vsel %vm721, %v804, 0.0
        %v835 = vadd.f32 %v833, %v834
        %v836 = vsel %vm721, %v806, 0.0
        %v837 = vadd.f32 %v835, %v836
        %v838 = vrot.slane %v837, 4
        %v839 = vadd.f32 %v837, %v838
        %v840 = vrot.slane %v839, 2
        %v841 = vadd.f32 %v839, %v840
        %v842 = vrot.slane %v841, 1
        %v843 = vadd.f32 %v841, %v842
        %v844 = vrcp.pop %v843
        %v845 = vmul.f32 %v843, %v844
        %v846 = vsub.f32 1.0, %v845
        %v847 = vmul.f32 %v844, %v846
        %v848 = vadd.f32 %v844, %v847
        %vm849 = vweird.f32 %v843
        %vm850 = vweird.f32 %v844
        %vm851 = vmor %vm849, %vm850
        %v852 = vsel %vm851, %v844, %v848
        %v853 = vand.u32 2147483647, %v843
        %vm854 = vcmp.eq.f32.partialorder %v853, 8.507059e+37
        %v855 = vand.u32 %v843, 2147483648
        %v856 = vor.u32 1.1754944e-38, %v855
        %v857 = vsel %vm854, %v856, %v852
        %v858 = vmul.f32 %v776, %v857
        %v859 = vmul.f32 %v778, %v857
        %v860 = vmul.f32 %v780, %v857
        %v861 = vmul.f32 %v782, %v857
        %v862 = vmul.f32 %v784, %v857
        %v863 = vmul.f32 %v786, %v857
        %v864 = vmul.f32 %v788, %v857
        %v865 = vmul.f32 %v790, %v857
        %v866 = vmul.f32 %v792, %v857
        %v867 = vmul.f32 %v794, %v857
        %v868 = vmul.f32 %v796, %v857
        %v869 = vmul.f32 %v798, %v857
        %v870 = vmul.f32 %v800, %v857
        %v871 = vmul.f32 %v802, %v857
        %v872 = vmul.f32 %v804, %v857
        %v873 = vmul.f32 %v806, %v857
        %875 = vset.pattern.permute.xlu0 0
        %876 = vperm.xlu0 %875, %v858
        %v877 = vpop.permute.xlu0 %876
        %880 = vset.pattern.permute.xlu0 0
        %881 = vperm.xlu0 %880, %v859
        %v882 = vpop.permute.xlu0 %881
        %885 = vset.pattern.permute.xlu0 0
        %886 = vperm.xlu0 %885, %v860
        %v887 = vpop.permute.xlu0 %886
        %890 = vset.pattern.permute.xlu0 0
        %891 = vperm.xlu0 %890, %v861
        %v892 = vpop.permute.xlu0 %891
        %895 = vset.pattern.permute.xlu0 0
        %896 = vperm.xlu0 %895, %v862
        %v897 = vpop.permute.xlu0 %896
        %900 = vset.pattern.permute.xlu0 0
        %901 = vperm.xlu0 %900, %v863
        %v902 = vpop.permute.xlu0 %901
        %905 = vset.pattern.permute.xlu0 0
        %906 = vperm.xlu0 %905, %v864
        %v907 = vpop.permute.xlu0 %906
        %910 = vset.pattern.permute.xlu0 0
        %911 = vperm.xlu0 %910, %v865
        %v912 = vpop.permute.xlu0 %911
        %915 = vset.pattern.permute.xlu0 0
        %916 = vperm.xlu0 %915, %v866
        %v917 = vpop.permute.xlu0 %916
        %920 = vset.pattern.permute.xlu0 0
        %921 = vperm.xlu0 %920, %v867
        %v922 = vpop.permute.xlu0 %921
        %925 = vset.pattern.permute.xlu0 0
        %926 = vperm.xlu0 %925, %v868
        %v927 = vpop.permute.xlu0 %926
        %930 = vset.pattern.permute.xlu0 0
        %931 = vperm.xlu0 %930, %v869
        %v932 = vpop.permute.xlu0 %931
        %935 = vset.pattern.permute.xlu0 0
        %936 = vperm.xlu0 %935, %v870
        %v937 = vpop.permute.xlu0 %936
        %940 = vset.pattern.permute.xlu0 0
        %941 = vperm.xlu0 %940, %v871
        %v942 = vpop.permute.xlu0 %941
        %945 = vset.pattern.permute.xlu0 0
        %946 = vperm.xlu0 %945, %v872
        %v947 = vpop.permute.xlu0 %946
        %950 = vset.pattern.permute.xlu0 0
        %951 = vperm.xlu0 %950, %v873
        %v952 = vpop.permute.xlu0 %951
        %v954 = vmul.f32 %v877, %v395
        %v955 = vmul.f32 %v882, %v396
        %v956 = vmul.f32 %v887, %v397
        %v957 = vmul.f32 %v892, %v398
        %v958 = vmul.f32 %v897, %v399
        %v959 = vmul.f32 %v902, %v400
        %v960 = vmul.f32 %v907, %v401
        %v961 = vmul.f32 %v912, %v402
        %v962 = vmul.f32 %v917, %v403
        %v963 = vmul.f32 %v922, %v404
        %v964 = vmul.f32 %v927, %v405
        %v965 = vmul.f32 %v932, %v406
        %v966 = vmul.f32 %v937, %v407
        %v967 = vmul.f32 %v942, %v408
        %v968 = vmul.f32 %v947, %v409
        %v969 = vmul.f32 %v952, %v410
        %v970 = vadd.f32 %v954, %v955
        %v971 = vadd.f32 %v970, %v956
        %v972 = vadd.f32 %v971, %v957
        %v973 = vadd.f32 %v972, %v958
        %v974 = vadd.f32 %v973, %v959
        %v975 = vadd.f32 %v974, %v960
        %v976 = vadd.f32 %v975, %v961
        %v977 = vadd.f32 %v976, %v962
        %v978 = vadd.f32 %v977, %v963
        %v979 = vadd.f32 %v978, %v964
        %v980 = vadd.f32 %v979, %v965
        %v981 = vadd.f32 %v980, %v966
        %v982 = vadd.f32 %v981, %v967
        %v983 = vadd.f32 %v982, %v968
        %v984 = vadd.f32 %v983, %v969
        %v985 = vrot.slane %v984, 4
        %v986 = vadd.f32 %v984, %v985
        %v987 = vrot.slane %v986, 2
        %v988 = vadd.f32 %v986, %v987
        %v989 = vrot.slane %v988, 1
        %v990 = vadd.f32 %v988, %v989
        %v991 = vadd.f32 %v990, %v411
        %992 = vst [vmem:[%s394] sm:$0x1] %v991
        %s993 = sand.u32 %s217, 1
        %s994 = scalar_lea.sflag [#allocation5], %s993
        %s995 = sand.u32 %s217, 1
        %s996 = scalar_lea.vmem [#allocation11], %s995
        // Predicated region
        $region69: #{tpu_custom_call.1} parent=51 // pred_check
          %p997 = pneg %p227
        $region70: #{tpu_custom_call.1} parent=51 // pred_check_branch
          %999 = sbr.rel (%p997) target = $region72
        $region71: #{tpu_custom_call.1} parent=51 // pred_region
          %1001 = vsyncadd %s994, 0
          %s1002 = scalar_lea.hbm %s8, %s31
          %s1004 = sshll.u32 %s996, 4
          %s1005 = int_to_ptr.vmem [resolvable:$true] %s1004
          %s1006 = sshll.u32 %s1002, 4
          %s1007 = int_to_ptr.hbm [resolvable:$true] %s1006
          %1009 = dma.vmem_to_hbm [thread:$0]  %s1005, 16, %s1007, %s994
        $region72: #{tpu_custom_call.1} parent=51 // pred_fallthru
          _
      $region52: #{tpu_custom_call.1} parent=5 // pred_fallthru
        _
      %p1010 = scmp.le.s32.totalorder 2, %s26
      // Predicated region
      $region73: #{tpu_custom_call.1} parent=5 // pred_check
        %p1011 = pneg %p1010
      $region74: #{tpu_custom_call.1} parent=5 // pred_check_branch
        %1013 = sbr.rel (%p1011) target = $region76
      $region75: #{tpu_custom_call.1} parent=5 // pred_region
        %s1014 = ssub.s32 %s26, 2
        // Predicated region
        $region77: #{tpu_custom_call.1} parent=75 // pred_check
          %p1015 = pneg %p233
        $region78: #{tpu_custom_call.1} parent=75 // pred_check_branch
          %1017 = sbr.rel (%p1015) target = $region80
        $region79: #{tpu_custom_call.1} parent=75 // pred_region
          %s1018 = sand.u32 %s218, 1
          %s1019 = scalar_lea.sflag [#allocation5], %s1018
          %s1020 = sand.u32 %s218, 1
          %s1021 = scalar_lea.vmem [#allocation11], %s1020
          %1023 = dma.done %s1019, 16
        $region80: #{tpu_custom_call.1} parent=75 // pred_fallthru
          _
      $region76: #{tpu_custom_call.1} parent=5 // pred_fallthru
        _
    $region6: #{tpu_custom_call.1} parent=1 // loop_footer
      %s30 = sadd.s32 1, %s26
    $region7: #{tpu_custom_call.1} parent=1 // loop_footer_branch
      %25 = sbr.rel target = $region3
    $region8: #{tpu_custom_call.1} parent=1 // loop_exit
      _
    %1024 = vsyncpa [#allocation4], 1
    %s1025 = scalar_lea.sflag [#allocation4], 1
    %1026 = vsyncpa %s1025, 1
    %1027 = vsyncpa [#allocation7], 1
    %s1028 = scalar_lea.sflag [#allocation7], 1
    %1029 = vsyncpa %s1028, 1
    %1030 = vsyncpa [#allocation10], 1
    %1031 = vsyncpa [#allocation5], 1
    %s1032 = scalar_lea.sflag [#allocation5], 1
    %1033 = vsyncpa %s1032, 1

</llo_original>
